<compile_context>
chip_gen: v7x
topology: tpu7x:2x2x1
jax: 0.10.0
libtpu: 0.0.40
codegen_flags: <defaults>
</compile_context>

<pallas_src>
import functools

import jax
import jax.numpy as jnp
from jax.experimental import pallas as pl
from jax.experimental.pallas import tpu as pltpu

_SUBLANE = 8


def _logits_d_kernel(x_ref, w1_ref, b1_ref, w2_ref, o_ref):
    # W1' already contains the 1/temperature scale and the +I residual fold, so
    # the whole block is: relu(x @ W1' + b1) @ W2.
    x = x_ref[...].astype(w1_ref.dtype)
    hid = jnp.dot(x, w1_ref[...], preferred_element_type=jnp.float32) + b1_ref[...]
    hid = jnp.maximum(hid, 0.0)
    o_ref[...] = jnp.dot(hid.astype(w2_ref.dtype), w2_ref[...],
                         preferred_element_type=jnp.float32).astype(o_ref.dtype)


def _vmem_bytes(tile, c, h, x_bytes, w_bytes, weight_bufs):
    # weight_bufs = 1 when resident operands are single-buffered, 2 otherwise
    # (Pallas double-buffers every input by default).
    weights = weight_bufs * ((c * h + h * h) * w_bytes + h * 4)
    io = 2 * tile * c * x_bytes + 2 * tile * h * 4     # double-buffered x / out tiles
    scratch = 2 * tile * h * 4                          # hid temporaries + headroom
    return weights + io + scratch


def _vmem_cap_bytes():
    # Generation-aware budget: ~3/4 of physical VMEM (v5e/v6e: 128 MiB -> 96 MiB,
    # v7x: 64 MiB -> 48 MiB), with a conservative fallback.
    try:
        cap = int(pltpu.get_tpu_info().vmem_capacity_bytes)
    except Exception:
        cap = 64 << 20
    return max(24 << 20, (cap * 3) // 4)


@functools.partial(
    jax.jit,
    static_argnames=("temperature", "tile", "use_bf16",
                     "single_buffer_weights", "vmem_limit"))
def _forward(logits, w1, b1, w2, *, temperature, tile, use_bf16,
             single_buffer_weights, vmem_limit):
    n, c = logits.shape
    h = w1.shape[1]
    w_dtype = jnp.bfloat16 if use_bf16 else jnp.float32

    inv_t = jnp.float32(1.0 / temperature)
    # Fold 1/temperature and the residual identity into W1 (requires C == H).
    w1p = (w1.astype(jnp.float32) * inv_t + jnp.eye(c, dtype=jnp.float32)).astype(w_dtype)
    b1p = b1.astype(jnp.float32).reshape(1, h)          # bias stays f32 (added post-acc)
    w2p = w2.astype(w_dtype)

    grid = (pl.cdiv(n, tile),)

    resident_kwargs = (
        dict(pipeline_mode=pl.Buffered(1)) if single_buffer_weights else {})
    w1_spec = pl.BlockSpec((c, h), lambda i: (0, 0), **resident_kwargs)
    b1_spec = pl.BlockSpec((1, h), lambda i: (0, 0), **resident_kwargs)
    w2_spec = pl.BlockSpec((h, h), lambda i: (0, 0), **resident_kwargs)

    x_bytes = logits.dtype.itemsize
    w_bytes = 2 if use_bf16 else 4
    cost = pl.CostEstimate(
        flops=2 * n * c * h + 2 * n * h * h,
        transcendentals=0,
        bytes_accessed=n * c * x_bytes + n * h * 4 + (c * h + h * h) * w_bytes + h * 4,
    )

    return pl.pallas_call(
        _logits_d_kernel,
        out_shape=jax.ShapeDtypeStruct((n, h), jnp.float32),
        grid=grid,
        in_specs=[
            pl.BlockSpec((tile, c), lambda i: (i, 0)),   # x tile (pipelined)
            w1_spec,                                     # W1' (resident)
            b1_spec,                                     # b1 (resident)
            w2_spec,                                     # W2 (resident)
        ],
        out_specs=pl.BlockSpec((tile, h), lambda i: (i, 0)),
        compiler_params=pltpu.CompilerParams(
            dimension_semantics=("parallel",),           # shards N across TCs on v7x
            vmem_limit_bytes=vmem_limit,
        ),
        cost_estimate=cost,
    )(logits, w1p, b1p, w2p)


def logits_d_forward(logits, w1, b1, w2, temperature=1.0, tile_n=4096, use_bf16=False):
    """logits: [N, C]; w1: [C, H]; b1: [H]; w2: [H, H]. Returns [N, H] float32."""
    n, c = logits.shape
    h = w1.shape[1]
    assert c == h, "residual connection requires in_channels == n_hidden"
    assert b1.shape == (h,) and w2.shape == (h, h)

    cap = _vmem_cap_bytes()
    x_bytes = jnp.dtype(logits.dtype).itemsize
    w_bytes = 2 if use_bf16 else 4

    resident_bytes = (c * h + h * h) * w_bytes + h * 4
    # TODO(synk): add a K/N-tiled fallback (3-axis grid + f32 VMEM accumulator) for
    # hidden sizes whose resident weights do not fit VMEM (H >~ 1800 v6e / 1300 v7x).
    if 2 * resident_bytes > cap:
        raise NotImplementedError("hidden size too large for the resident-weight kernel")

    def plan_tile(weight_bufs):
        tile = min(int(tile_n), n)
        if tile < n:
            tile = max(_SUBLANE, (tile // _SUBLANE) * _SUBLANE)
        # Shrink (by halving) until the block fits the VMEM budget; a full-array
        # block (tile == n) is always layout-legal, partial tiles stay x8-aligned.
        while tile > _SUBLANE and _vmem_bytes(tile, c, h, x_bytes, w_bytes,
                                              weight_bufs) > cap:
            tile = max(_SUBLANE, ((tile // 2) // _SUBLANE) * _SUBLANE)
        return tile

    vmem_limit = int(min(cap, 100 << 20))
    kwargs = dict(temperature=float(temperature), use_bf16=bool(use_bf16),
                  vmem_limit=vmem_limit)

    try:
        # Preferred: single-buffered resident weights (frees ~P^2*8 bytes of VMEM).
        return _forward(logits, w1, b1, w2, tile=plan_tile(1),
                        single_buffer_weights=True, **kwargs)
    except Exception:
        # Fallback if this Pallas build rejects pl.Buffered(1): default pipeline,
        # with the budget model correctly counting double-buffered weights.
        return _forward(logits, w1, b1, w2, tile=plan_tile(2),
                        single_buffer_weights=False, **kwargs)


def reference_forward(logits, w1, b1, w2, temperature=1.0):
    out = (logits / temperature) @ w1 + b1
    out = jnp.maximum(logits + out, 0.0)
    return out @ w2


if __name__ == "__main__":
    key = jax.random.PRNGKey(0)
    k_x, k_w1, k_b1, k_w2, k_x2 = jax.random.split(key, 5)

    # Small shapes consistent with the module: the residual forces C == H.
    N, C, H = 8, 32, 32
    logits = jax.random.normal(k_x, (N, C), dtype=jnp.float32)
    bound1 = 1.0 / (C ** 0.5)
    w1 = jax.random.uniform(k_w1, (C, H), minval=-bound1, maxval=bound1, dtype=jnp.float32)
    b1 = jax.random.uniform(k_b1, (H,), minval=-bound1, maxval=bound1, dtype=jnp.float32)
    bound2 = 1.0 / (H ** 0.5)
    w2 = jax.random.uniform(k_w2, (H, H), minval=-bound2, maxval=bound2, dtype=jnp.float32)

    temperature = 2.0

    # 1) single-block path, f32 matmuls
    out = jax.block_until_ready(
        logits_d_forward(logits, w1, b1, w2, temperature=temperature))
    ref = reference_forward(logits, w1, b1, w2, temperature=temperature)
    assert out.shape == (N, H)
    assert jnp.allclose(out, ref, atol=1e-5, rtol=1e-5), "mismatch vs reference (small)"

    # 2) multi-step grid with a ragged remainder block (no N padding in HBM)
    N2 = 300
    logits2 = jax.random.normal(k_x2, (N2, C), dtype=jnp.float32)
    out2 = jax.block_until_ready(
        logits_d_forward(logits2, w1, b1, w2, temperature=temperature, tile_n=128))
    ref2 = reference_forward(logits2, w1, b1, w2, temperature=temperature)
    assert out2.shape == (N2, H)
    assert jnp.allclose(out2, ref2, atol=1e-5, rtol=1e-5), "mismatch vs reference (tiled)"

    # 3) bf16-MXU path (f32 accumulation) — looser tolerance
    out3 = jax.block_until_ready(
        logits_d_forward(logits2, w1, b1, w2, temperature=temperature, use_bf16=True))
    assert out3.shape == (N2, H)
    assert jnp.allclose(out3, ref2, atol=5e-2, rtol=5e-2), "mismatch vs reference (bf16)"

    print("KERNEL_OK")
</pallas_src>

<mosaic_0001>
module attributes {stable_mosaic.version = 11 : i64} {
  func.func @_logits_d_kernel(%arg0: i32, %arg1: memref<8x32xf32, #tpu.memory_space<vmem>>, %arg2: memref<32x32xf32, #tpu.memory_space<vmem>>, %arg3: memref<1x32xf32, #tpu.memory_space<vmem>>, %arg4: memref<32x32xf32, #tpu.memory_space<vmem>>, %arg5: memref<8x32xf32, #tpu.memory_space<vmem>>) attributes {dimension_semantics = [#tpu.dimension_semantics<parallel>], iteration_bounds = array<i64: 1>, scalar_prefetch = 0 : i64, scratch_operands = 0 : i64, tpu.core_type = #tpu.core_type<tc>, window_params = [{transform_indices = @transform_0, window_bounds = array<i64: 8, 32>}, {pipeline_mode = #tpu.pipeline_mode<synchronous>, transform_indices = @transform_1, window_bounds = array<i64: 32, 32>}, {pipeline_mode = #tpu.pipeline_mode<synchronous>, transform_indices = @transform_2, window_bounds = array<i64: 1, 32>}, {pipeline_mode = #tpu.pipeline_mode<synchronous>, transform_indices = @transform_3, window_bounds = array<i64: 32, 32>}, {transform_indices = @transform_4, window_bounds = array<i64: 8, 32>}]} {
    %c0 = arith.constant 0 : index
    %c0_0 = arith.constant 0 : index
    %0 = vector.load %arg1[%c0, %c0_0] : memref<8x32xf32, #tpu.memory_space<vmem>>, vector<8x32xf32>
    %c0_1 = arith.constant 0 : index
    %c0_2 = arith.constant 0 : index
    %1 = vector.load %arg2[%c0_1, %c0_2] : memref<32x32xf32, #tpu.memory_space<vmem>>, vector<32x32xf32>
    %cst = arith.constant dense<0.000000e+00> : vector<8x32xf32>
    %2 = tpu.matmul %0, %1, %cst {dimension_numbers = #tpu.dot_dimension_numbers<[1], [0], [0], [1], [0, 0, 1, 1], [], []>} : vector<8x32xf32>, vector<32x32xf32>, vector<8x32xf32> -> vector<8x32xf32>
    %c0_3 = arith.constant 0 : index
    %c0_4 = arith.constant 0 : index
    %3 = vector.load %arg3[%c0_3, %c0_4] : memref<1x32xf32, #tpu.memory_space<vmem>>, vector<1x32xf32>
    %4 = vector.broadcast %3 : vector<1x32xf32> to vector<8x32xf32>
    %5 = arith.addf %2, %4 : vector<8x32xf32>
    %cst_5 = arith.constant 0.000000e+00 : f32
    %6 = vector.broadcast %cst_5 : f32 to vector<8x32xf32>
    %7 = arith.maximumf %5, %6 : vector<8x32xf32>
    %c0_6 = arith.constant 0 : index
    %c0_7 = arith.constant 0 : index
    %8 = vector.load %arg4[%c0_6, %c0_7] : memref<32x32xf32, #tpu.memory_space<vmem>>, vector<32x32xf32>
    %cst_8 = arith.constant dense<0.000000e+00> : vector<8x32xf32>
    %9 = tpu.matmul %7, %8, %cst_8 {dimension_numbers = #tpu.dot_dimension_numbers<[1], [0], [0], [1], [0, 0, 1, 1], [], []>} : vector<8x32xf32>, vector<32x32xf32>, vector<8x32xf32> -> vector<8x32xf32>
    %c0_9 = arith.constant 0 : index
    %c0_10 = arith.constant 0 : index
    %10 = vector.load %arg5[%c0_9, %c0_10] : memref<8x32xf32, #tpu.memory_space<vmem>>, vector<8x32xf32>
    tpu.vector_store %arg5[%c0_9, %c0_10], %9 {strides = array<i32>} : memref<8x32xf32, #tpu.memory_space<vmem>>, vector<8x32xf32>,
    return
  }
  func.func @transform_0(%arg0: i32) -> (i32, i32) {
    %c0_i32 = arith.constant 0 : i32
    %c0_i32_0 = arith.constant 0 : i32
    return %arg0, %c0_i32 : i32, i32
  }
  func.func @transform_1(%arg0: i32) -> (i32, i32) {
    %c0_i32 = arith.constant 0 : i32
    %c0_i32_0 = arith.constant 0 : i32
    %c0_i32_1 = arith.constant 0 : i32
    return %c0_i32, %c0_i32_0 : i32, i32
  }
  func.func @transform_2(%arg0: i32) -> (i32, i32) {
    %c0_i32 = arith.constant 0 : i32
    %c0_i32_0 = arith.constant 0 : i32
    %c0_i32_1 = arith.constant 0 : i32
    return %c0_i32, %c0_i32_0 : i32, i32
  }
  func.func @transform_3(%arg0: i32) -> (i32, i32) {
    %c0_i32 = arith.constant 0 : i32
    %c0_i32_0 = arith.constant 0 : i32
    %c0_i32_1 = arith.constant 0 : i32
    return %c0_i32, %c0_i32_0 : i32, i32
  }
  func.func @transform_4(%arg0: i32) -> (i32, i32) {
    %c0_i32 = arith.constant 0 : i32
    %c0_i32_0 = arith.constant 0 : i32
    return %arg0, %c0_i32 : i32, i32
  }
}

module attributes {stable_mosaic.version = 11 : i64} {
  func.func @_logits_d_kernel(%arg0: i32, %arg1: memref<8x32xf32, #tpu.memory_space<vmem>>, %arg2: memref<32x32xf32, #tpu.memory_space<vmem>>, %arg3: memref<1x32xf32, #tpu.memory_space<vmem>>, %arg4: memref<32x32xf32, #tpu.memory_space<vmem>>, %arg5: memref<8x32xf32, #tpu.memory_space<vmem>>) attributes {dimension_semantics = [#tpu.dimension_semantics<parallel>], iteration_bounds = array<i64: 1>, scalar_prefetch = 0 : i64, scratch_operands = 0 : i64, tpu.core_type = #tpu.core_type<tc>, window_params = [{transform_indices = @transform_0, window_bounds = array<i64: 8, 32>}, {pipeline_mode = #tpu.pipeline_mode<synchronous>, transform_indices = @transform_1, window_bounds = array<i64: 32, 32>}, {pipeline_mode = #tpu.pipeline_mode<synchronous>, transform_indices = @transform_2, window_bounds = array<i64: 1, 32>}, {pipeline_mode = #tpu.pipeline_mode<synchronous>, transform_indices = @transform_3, window_bounds = array<i64: 32, 32>}, {transform_indices = @transform_4, window_bounds = array<i64: 8, 32>}]} {
    %c0 = arith.constant 0 : index
    %c0_0 = arith.constant 0 : index
    %0 = vector.load %arg1[%c0, %c0_0] : memref<8x32xf32, #tpu.memory_space<vmem>>, vector<8x32xf32>
    %c0_1 = arith.constant 0 : index
    %c0_2 = arith.constant 0 : index
    %1 = vector.load %arg2[%c0_1, %c0_2] : memref<32x32xf32, #tpu.memory_space<vmem>>, vector<32x32xf32>
    %cst = arith.constant dense<0.000000e+00> : vector<8x32xf32>
    %2 = tpu.matmul %0, %1, %cst {dimension_numbers = #tpu.dot_dimension_numbers<[1], [0], [0], [1], [0, 0, 1, 1], [], []>} : vector<8x32xf32>, vector<32x32xf32>, vector<8x32xf32> -> vector<8x32xf32>
    %c0_3 = arith.constant 0 : index
    %c0_4 = arith.constant 0 : index
    %3 = vector.load %arg3[%c0_3, %c0_4] : memref<1x32xf32, #tpu.memory_space<vmem>>, vector<1x32xf32>
    %4 = vector.broadcast %3 : vector<1x32xf32> to vector<8x32xf32>
    %5 = arith.addf %2, %4 : vector<8x32xf32>
    %cst_5 = arith.constant 0.000000e+00 : f32
    %6 = vector.broadcast %cst_5 : f32 to vector<8x32xf32>
    %7 = arith.maximumf %5, %6 : vector<8x32xf32>
    %c0_6 = arith.constant 0 : index
    %c0_7 = arith.constant 0 : index
    %8 = vector.load %arg4[%c0_6, %c0_7] : memref<32x32xf32, #tpu.memory_space<vmem>>, vector<32x32xf32>
    %cst_8 = arith.constant dense<0.000000e+00> : vector<8x32xf32>
    %9 = tpu.matmul %7, %8, %cst_8 {dimension_numbers = #tpu.dot_dimension_numbers<[1], [0], [0], [1], [0, 0, 1, 1], [], []>} : vector<8x32xf32>, vector<32x32xf32>, vector<8x32xf32> -> vector<8x32xf32>
    %c0_9 = arith.constant 0 : index
    %c0_10 = arith.constant 0 : index
    %10 = vector.load %arg5[%c0_9, %c0_10] : memref<8x32xf32, #tpu.memory_space<vmem>>, vector<8x32xf32>
    tpu.vector_store %arg5[%c0_9, %c0_10], %9 {strides = array<i32>} : memref<8x32xf32, #tpu.memory_space<vmem>>, vector<8x32xf32>,
    return
  }
  func.func @transform_0(%arg0: i32) -> (i32, i32) {
    %c0_i32 = arith.constant 0 : i32
    %c0_i32_0 = arith.constant 0 : i32
    return %arg0, %c0_i32 : i32, i32
  }
  func.func @transform_1(%arg0: i32) -> (i32, i32) {
    %c0_i32 = arith.constant 0 : i32
    %c0_i32_0 = arith.constant 0 : i32
    %c0_i32_1 = arith.constant 0 : i32
    return %c0_i32, %c0_i32_0 : i32, i32
  }
  func.func @transform_2(%arg0: i32) -> (i32, i32) {
    %c0_i32 = arith.constant 0 : i32
    %c0_i32_0 = arith.constant 0 : i32
    %c0_i32_1 = arith.constant 0 : i32
    return %c0_i32, %c0_i32_0 : i32, i32
  }
  func.func @transform_3(%arg0: i32) -> (i32, i32) {
    %c0_i32 = arith.constant 0 : i32
    %c0_i32_0 = arith.constant 0 : i32
    %c0_i32_1 = arith.constant 0 : i32
    return %c0_i32, %c0_i32_0 : i32, i32
  }
  func.func @transform_4(%arg0: i32) -> (i32, i32) {
    %c0_i32 = arith.constant 0 : i32
    %c0_i32_0 = arith.constant 0 : i32
    return %arg0, %c0_i32 : i32, i32
  }
}

</mosaic_0001>

<llo_original>
// kernel: _forward.1
$region0: #{_forward.1}
  #allocation0 [shape = 'u32[]', space=smem, size = 0x4, offset = 0x4, fixed_abs, tag = 'smem constant byte address 0x4 - core index']
  #allocation1 [shape = 'u32[144,128]{1,0:T(1,128)}', space=vmem, size = 0x12000, scoped, tag = 'internal scratch']
  %s0 = inlined_call_operand.vmem [shape: f32[8,32], index: 0, kind: input, shape index: {}]
  %s1 = inlined_call_operand.vmem [shape: f32[32,32], index: 1, kind: input, shape index: {}]
  %s2 = inlined_call_operand.vmem [shape: f32[1,32], index: 2, kind: input, shape index: {}]
  %s3 = inlined_call_operand.vmem [shape: f32[32,32], index: 3, kind: input, shape index: {}]
  %s4 = inlined_call_operand.hbm [shape: f32[8,32], index: 4, kind: output, shape index: {}]
  %s5 = sld [smem:[#allocation0]]
  $region26: #{_forward.1} parent=0
    _
  %s7 = ssub.s32 1, %s5
  %s8 = scalar_select 0, %s7, %s5
  $region1: #{_forward.1} parent=0
    #allocation2 [shape = 'u8[4096]{0}', space=vmem, size = 0x1000, scoped, tag = 'output window, operand 0, single buffered']
    #allocation3 [shape = 's32[1]{0}', space=sflag, size = 0x4, scoped, tag = 'scoped memory for _forward.1']
    %9 = vsyncpa [#allocation3], 0
    // Predicated region
    $region2: #{_forward.1} parent=1 // pred_check
      _
    $region3: #{_forward.1} parent=1 // pred_check_branch
      %11 = sbr.rel (0) target = $region5
    $region4: #{_forward.1} parent=1 // pred_region
      _
    $region5: #{_forward.1} parent=1 // pred_fallthru
      _
    // Predicated region
    $region6: #{_forward.1} parent=1 // pred_check
      _
    $region7: #{_forward.1} parent=1 // pred_check_branch
      %13 = sbr.rel (0) target = $region9
    $region8: #{_forward.1} parent=1 // pred_region
      _
    $region9: #{_forward.1} parent=1 // pred_fallthru
      _
    // Predicated region
    $region10: #{_forward.1} parent=1 // pred_check
      _
    $region11: #{_forward.1} parent=1 // pred_check_branch
      %15 = sbr.rel (0) target = $region13
    $region12: #{_forward.1} parent=1 // pred_region
      _
    $region13: #{_forward.1} parent=1 // pred_fallthru
      _
    // Predicated region
    $region14: #{_forward.1} parent=1 // pred_check
      _
    $region15: #{_forward.1} parent=1 // pred_check_branch
      %17 = sbr.rel (0) target = $region17
    $region16: #{_forward.1} parent=1 // pred_region
      _
    $region17: #{_forward.1} parent=1 // pred_fallthru
      _
    %v18 = vld [vmem:[%s0] sm:$0xff]
    %v19 = vld [vmem:[%s1] sm:$0xff]
    %v20 = vld [vmem:[%s1 + $0x8] sm:$0xff]
    %v21 = vld [vmem:[%s1 + $0x10] sm:$0xff]
    %v22 = vld [vmem:[%s1 + $0x18] sm:$0xff]
    %v23 = vld [vmem:[%s2] sm:$0x1]
    %v25 = vlaneseq
    %v26 = vshrl.u32 %v25, 7
    %v27 = vsub.s32 0, %v26
    %v28 = vrot.slane %v23, %v27
    %vm30 = vcmask 261120
    %v32 = vsel %vm30, %v18, 0
    %34 = vmatprep.subr.mxu0 0.0
    %35 = vmatpush1.msra.mxu0 %v19
    %36 = vmatprep.subr.mxu0 0.0
    %37 = vmatpush1.msra.mxu0 %v20
    %38 = vmatprep.subr.mxu0 0.0
    %39 = vmatpush1.msra.mxu0 %v21
    %40 = vmatprep.subr.mxu0 0.0
    %41 = vmatpush1.msra.mxu0 %v22
    %42 = vmatprep.subr.mxu0 0.0
    %43 = vmatpush1.msra.mxu0 0.0
    %44 = vmatprep.subr.mxu0 0.0
    %45 = vmatpush1.msra.mxu0 0.0
    %46 = vmatprep.subr.mxu0 0.0
    %47 = vmatpush1.msra.mxu0 0.0
    %48 = vmatprep.subr.mxu0 0.0
    %49 = vmatpush1.msra.mxu0 0.0
    %50 = vmatprep.subr.mxu0 0.0
    %51 = vmatpush1.msra.mxu0 0.0
    %52 = vmatprep.subr.mxu0 0.0
    %53 = vmatpush1.msra.mxu0 0.0
    %54 = vmatprep.subr.mxu0 0.0
    %55 = vmatpush1.msra.mxu0 0.0
    %56 = vmatprep.subr.mxu0 0.0
    %57 = vmatpush1.msra.mxu0 0.0
    %58 = vmatprep.subr.mxu0 0.0
    %59 = vmatpush1.msra.mxu0 0.0
    %60 = vmatprep.subr.mxu0 0.0
    %61 = vmatpush1.msra.mxu0 0.0
    %62 = vmatprep.subr.mxu0 0.0
    %63 = vmatpush1.msra.mxu0 0.0
    %64 = vmatprep.subr.mxu0 0.0
    %65 = vmatpush1.msra.mxu0 0.0
    %66 = vmatprep.subr.mxu0 0.0
    %67 = vmatpush1.msra.mxu0 0.0
    %68 = vmatprep.subr.mxu0 0.0
    %69 = vmatpush1.msra.mxu0 0.0
    %70 = vmatprep.subr.mxu0 0.0
    %71 = vmatpush1.msra.mxu0 0.0
    %72 = vmatprep.subr.mxu0 0.0
    %73 = vmatpush1.msra.mxu0 0.0
    %74 = vmatprep.subr.mxu0 0.0
    %75 = vmatpush1.msra.mxu0 0.0
    %76 = vmatprep.subr.mxu0 0.0
    %77 = vmatpush1.msra.mxu0 0.0
    %78 = vmatprep.subr.mxu0 0.0
    %79 = vmatpush1.msra.mxu0 0.0
    %80 = vmatprep.subr.mxu0 0.0
    %81 = vmatpush1.msra.mxu0 0.0
    %82 = vmatprep.subr.mxu0 0.0
    %83 = vmatpush1.msra.mxu0 0.0
    %84 = vmatprep.subr.mxu0 0.0
    %85 = vmatpush1.msra.mxu0 0.0
    %86 = vmatprep.subr.mxu0 0.0
    %87 = vmatpush1.msra.mxu0 0.0
    %88 = vmatprep.subr.mxu0 0.0
    %89 = vmatpush1.msra.mxu0 0.0
    %90 = vmatprep.subr.mxu0 0.0
    %91 = vmatpush1.msra.mxu0 0.0
    %92 = vmatprep.subr.mxu0 0.0
    %93 = vmatpush1.msra.mxu0 0.0
    %94 = vmatprep.subr.mxu0 0.0
    %95 = vmatpush1.msra.mxu0 0.0
    %96 = vmatprep.subr.mxu0 0.0
    %97 = vmatpush1.msra.mxu0 0.0
    %98 = vmatprep.mubr.f32.mxu0 0.0
    %99 = vmatmul.mubr.f32.gmra.mrb[0].mxu0 %v32
    %v100 = vpop.f32.mrb[0].mxu0
    %v101 = vadd.f32 %v28, %v100
    %v102 = vpop.f32.mrb[0].mxu0
    %103 = vdwg.mxu0
    %v104 = vmax.f32 %v101, 0.0
    %v105 = vld [vmem:[%s3] sm:$0xff]
    %v106 = vld [vmem:[%s3 + $0x8] sm:$0xff]
    %v107 = vld [vmem:[%s3 + $0x10] sm:$0xff]
    %v108 = vld [vmem:[%s3 + $0x18] sm:$0xff]
    %v110 = vsel %vm30, %v104, 0
    %112 = vmatprep.subr.mxu0 0.0
    %113 = vmatpush1.msra.mxu0 %v105
    %114 = vmatprep.subr.mxu0 0.0
    %115 = vmatpush1.msra.mxu0 %v106
    %116 = vmatprep.subr.mxu0 0.0
    %117 = vmatpush1.msra.mxu0 %v107
    %118 = vmatprep.subr.mxu0 0.0
    %119 = vmatpush1.msra.mxu0 %v108
    %120 = vmatprep.subr.mxu0 0.0
    %121 = vmatpush1.msra.mxu0 0.0
    %122 = vmatprep.subr.mxu0 0.0
    %123 = vmatpush1.msra.mxu0 0.0
    %124 = vmatprep.subr.mxu0 0.0
    %125 = vmatpush1.msra.mxu0 0.0
    %126 = vmatprep.subr.mxu0 0.0
    %127 = vmatpush1.msra.mxu0 0.0
    %128 = vmatprep.subr.mxu0 0.0
    %129 = vmatpush1.msra.mxu0 0.0
    %130 = vmatprep.subr.mxu0 0.0
    %131 = vmatpush1.msra.mxu0 0.0
    %132 = vmatprep.subr.mxu0 0.0
    %133 = vmatpush1.msra.mxu0 0.0
    %134 = vmatprep.subr.mxu0 0.0
    %135 = vmatpush1.msra.mxu0 0.0
    %136 = vmatprep.subr.mxu0 0.0
    %137 = vmatpush1.msra.mxu0 0.0
    %138 = vmatprep.subr.mxu0 0.0
    %139 = vmatpush1.msra.mxu0 0.0
    %140 = vmatprep.subr.mxu0 0.0
    %141 = vmatpush1.msra.mxu0 0.0
    %142 = vmatprep.subr.mxu0 0.0
    %143 = vmatpush1.msra.mxu0 0.0
    %144 = vmatprep.subr.mxu0 0.0
    %145 = vmatpush1.msra.mxu0 0.0
    %146 = vmatprep.subr.mxu0 0.0
    %147 = vmatpush1.msra.mxu0 0.0
    %148 = vmatprep.subr.mxu0 0.0
    %149 = vmatpush1.msra.mxu0 0.0
    %150 = vmatprep.subr.mxu0 0.0
    %151 = vmatpush1.msra.mxu0 0.0
    %152 = vmatprep.subr.mxu0 0.0
    %153 = vmatpush1.msra.mxu0 0.0
    %154 = vmatprep.subr.mxu0 0.0
    %155 = vmatpush1.msra.mxu0 0.0
    %156 = vmatprep.subr.mxu0 0.0
    %157 = vmatpush1.msra.mxu0 0.0
    %158 = vmatprep.subr.mxu0 0.0
    %159 = vmatpush1.msra.mxu0 0.0
    %160 = vmatprep.subr.mxu0 0.0
    %161 = vmatpush1.msra.mxu0 0.0
    %162 = vmatprep.subr.mxu0 0.0
    %163 = vmatpush1.msra.mxu0 0.0
    %164 = vmatprep.subr.mxu0 0.0
    %165 = vmatpush1.msra.mxu0 0.0
    %166 = vmatprep.subr.mxu0 0.0
    %167 = vmatpush1.msra.mxu0 0.0
    %168 = vmatprep.subr.mxu0 0.0
    %169 = vmatpush1.msra.mxu0 0.0
    %170 = vmatprep.subr.mxu0 0.0
    %171 = vmatpush1.msra.mxu0 0.0
    %172 = vmatprep.subr.mxu0 0.0
    %173 = vmatpush1.msra.mxu0 0.0
    %174 = vmatprep.subr.mxu0 0.0
    %175 = vmatpush1.msra.mxu0 0.0
    %176 = vmatprep.mubr.f32.mxu0 0.0
    %177 = vmatmul.mubr.f32.gmra.mrb[0].mxu0 %v110
    %v178 = vpop.f32.mrb[0].mxu0
    %v179 = vadd.f32 0.0, %v178
    %v180 = vpop.f32.mrb[0].mxu0
    %181 = vdwg.mxu0
    %182 = vst.msk [vmem:[#allocation2] sm:$0xff] %vm30, %v179
    // Predicated region
    $region18: #{_forward.1} parent=1 // pred_check
      _
    $region19: #{_forward.1} parent=1 // pred_check_branch
      %184 = sbr.rel (0) target = $region21
    $region20: #{_forward.1} parent=1 // pred_region
      %s186 = ssub.s32 128, 128
      %187 = vsyncadd [#allocation3], %s186
      %s189 = sshll.u32 [#allocation2], 4
      %s190 = int_to_ptr.vmem [resolvable:$true] %s189
      %192 = dma.vmem_to_hbm [thread:$0]  %s190, 128, %s4, [#allocation3]
    $region21: #{_forward.1} parent=1 // pred_fallthru
      _
    // Predicated region
    $region22: #{_forward.1} parent=1 // pred_check
      _
    $region23: #{_forward.1} parent=1 // pred_check_branch
      %194 = sbr.rel (0) target = $region25
    $region24: #{_forward.1} parent=1 // pred_region
      %195 = dma.done [#allocation3], 128
    $region25: #{_forward.1} parent=1 // pred_fallthru
      _
    %196 = vsyncpa [#allocation3], 1

// kernel: _forward.1
$region0: #{_forward.1}
  #allocation0 [shape = 'u32[]', space=smem, size = 0x4, offset = 0x4, fixed_abs, tag = 'smem constant byte address 0x4 - core index']
  #allocation1 [shape = 'u32[144,128]{1,0:T(1,128)}', space=vmem, size = 0x12000, scoped, tag = 'internal scratch']
  %s0 = inlined_call_operand.vmem [shape: f32[8,32], index: 0, kind: input, shape index: {}]
  %s1 = inlined_call_operand.vmem [shape: f32[32,32], index: 1, kind: input, shape index: {}]
  %s2 = inlined_call_operand.vmem [shape: f32[1,32], index: 2, kind: input, shape index: {}]
  %s3 = inlined_call_operand.vmem [shape: f32[32,32], index: 3, kind: input, shape index: {}]
  %s4 = inlined_call_operand.hbm [shape: f32[8,32], index: 4, kind: output, shape index: {}]
  %s5 = sld [smem:[#allocation0]]
  $region26: #{_forward.1} parent=0
    _
  %s7 = ssub.s32 1, %s5
  %s8 = scalar_select 0, %s7, %s5
  $region1: #{_forward.1} parent=0
    #allocation2 [shape = 'u8[4096]{0}', space=vmem, size = 0x1000, scoped, tag = 'output window, operand 0, single buffered']
    #allocation3 [shape = 's32[1]{0}', space=sflag, size = 0x4, scoped, tag = 'scoped memory for _forward.1']
    %9 = vsyncpa [#allocation3], 0
    // Predicated region
    $region2: #{_forward.1} parent=1 // pred_check
      _
    $region3: #{_forward.1} parent=1 // pred_check_branch
      %11 = sbr.rel (0) target = $region5
    $region4: #{_forward.1} parent=1 // pred_region
      _
    $region5: #{_forward.1} parent=1 // pred_fallthru
      _
    // Predicated region
    $region6: #{_forward.1} parent=1 // pred_check
      _
    $region7: #{_forward.1} parent=1 // pred_check_branch
      %13 = sbr.rel (0) target = $region9
    $region8: #{_forward.1} parent=1 // pred_region
      _
    $region9: #{_forward.1} parent=1 // pred_fallthru
      _
    // Predicated region
    $region10: #{_forward.1} parent=1 // pred_check
      _
    $region11: #{_forward.1} parent=1 // pred_check_branch
      %15 = sbr.rel (0) target = $region13
    $region12: #{_forward.1} parent=1 // pred_region
      _
    $region13: #{_forward.1} parent=1 // pred_fallthru
      _
    // Predicated region
    $region14: #{_forward.1} parent=1 // pred_check
      _
    $region15: #{_forward.1} parent=1 // pred_check_branch
      %17 = sbr.rel (0) target = $region17
    $region16: #{_forward.1} parent=1 // pred_region
      _
    $region17: #{_forward.1} parent=1 // pred_fallthru
      _
    %v18 = vld [vmem:[%s0] sm:$0xff]
    %v19 = vld [vmem:[%s1] sm:$0xff]
    %v20 = vld [vmem:[%s1 + $0x8] sm:$0xff]
    %v21 = vld [vmem:[%s1 + $0x10] sm:$0xff]
    %v22 = vld [vmem:[%s1 + $0x18] sm:$0xff]
    %v23 = vld [vmem:[%s2] sm:$0x1]
    %v25 = vlaneseq
    %v26 = vshrl.u32 %v25, 7
    %v27 = vsub.s32 0, %v26
    %v28 = vrot.slane %v23, %v27
    %vm30 = vcmask 261120
    %v32 = vsel %vm30, %v18, 0
    %34 = vmatprep.subr.mxu0 0.0
    %35 = vmatpush1.msra.mxu0 %v19
    %36 = vmatprep.subr.mxu0 0.0
    %37 = vmatpush1.msra.mxu0 %v20
    %38 = vmatprep.subr.mxu0 0.0
    %39 = vmatpush1.msra.mxu0 %v21
    %40 = vmatprep.subr.mxu0 0.0
    %41 = vmatpush1.msra.mxu0 %v22
    %42 = vmatprep.subr.mxu0 0.0
    %43 = vmatpush1.msra.mxu0 0.0
    %44 = vmatprep.subr.mxu0 0.0
    %45 = vmatpush1.msra.mxu0 0.0
    %46 = vmatprep.subr.mxu0 0.0
    %47 = vmatpush1.msra.mxu0 0.0
    %48 = vmatprep.subr.mxu0 0.0
    %49 = vmatpush1.msra.mxu0 0.0
    %50 = vmatprep.subr.mxu0 0.0
    %51 = vmatpush1.msra.mxu0 0.0
    %52 = vmatprep.subr.mxu0 0.0
    %53 = vmatpush1.msra.mxu0 0.0
    %54 = vmatprep.subr.mxu0 0.0
    %55 = vmatpush1.msra.mxu0 0.0
    %56 = vmatprep.subr.mxu0 0.0
    %57 = vmatpush1.msra.mxu0 0.0
    %58 = vmatprep.subr.mxu0 0.0
    %59 = vmatpush1.msra.mxu0 0.0
    %60 = vmatprep.subr.mxu0 0.0
    %61 = vmatpush1.msra.mxu0 0.0
    %62 = vmatprep.subr.mxu0 0.0
    %63 = vmatpush1.msra.mxu0 0.0
    %64 = vmatprep.subr.mxu0 0.0
    %65 = vmatpush1.msra.mxu0 0.0
    %66 = vmatprep.subr.mxu0 0.0
    %67 = vmatpush1.msra.mxu0 0.0
    %68 = vmatprep.subr.mxu0 0.0
    %69 = vmatpush1.msra.mxu0 0.0
    %70 = vmatprep.subr.mxu0 0.0
    %71 = vmatpush1.msra.mxu0 0.0
    %72 = vmatprep.subr.mxu0 0.0
    %73 = vmatpush1.msra.mxu0 0.0
    %74 = vmatprep.subr.mxu0 0.0
    %75 = vmatpush1.msra.mxu0 0.0
    %76 = vmatprep.subr.mxu0 0.0
    %77 = vmatpush1.msra.mxu0 0.0
    %78 = vmatprep.subr.mxu0 0.0
    %79 = vmatpush1.msra.mxu0 0.0
    %80 = vmatprep.subr.mxu0 0.0
    %81 = vmatpush1.msra.mxu0 0.0
    %82 = vmatprep.subr.mxu0 0.0
    %83 = vmatpush1.msra.mxu0 0.0
    %84 = vmatprep.subr.mxu0 0.0
    %85 = vmatpush1.msra.mxu0 0.0
    %86 = vmatprep.subr.mxu0 0.0
    %87 = vmatpush1.msra.mxu0 0.0
    %88 = vmatprep.subr.mxu0 0.0
    %89 = vmatpush1.msra.mxu0 0.0
    %90 = vmatprep.subr.mxu0 0.0
    %91 = vmatpush1.msra.mxu0 0.0
    %92 = vmatprep.subr.mxu0 0.0
    %93 = vmatpush1.msra.mxu0 0.0
    %94 = vmatprep.subr.mxu0 0.0
    %95 = vmatpush1.msra.mxu0 0.0
    %96 = vmatprep.subr.mxu0 0.0
    %97 = vmatpush1.msra.mxu0 0.0
    %98 = vmatprep.mubr.f32.mxu0 0.0
    %99 = vmatmul.mubr.f32.gmra.mrb[0].mxu0 %v32
    %v100 = vpop.f32.mrb[0].mxu0
    %v101 = vadd.f32 %v28, %v100
    %v102 = vpop.f32.mrb[0].mxu0
    %103 = vdwg.mxu0
    %v104 = vmax.f32 %v101, 0.0
    %v105 = vld [vmem:[%s3] sm:$0xff]
    %v106 = vld [vmem:[%s3 + $0x8] sm:$0xff]
    %v107 = vld [vmem:[%s3 + $0x10] sm:$0xff]
    %v108 = vld [vmem:[%s3 + $0x18] sm:$0xff]
    %v110 = vsel %vm30, %v104, 0
    %112 = vmatprep.subr.mxu0 0.0
    %113 = vmatpush1.msra.mxu0 %v105
    %114 = vmatprep.subr.mxu0 0.0
    %115 = vmatpush1.msra.mxu0 %v106
    %116 = vmatprep.subr.mxu0 0.0
    %117 = vmatpush1.msra.mxu0 %v107
    %118 = vmatprep.subr.mxu0 0.0
    %119 = vmatpush1.msra.mxu0 %v108
    %120 = vmatprep.subr.mxu0 0.0
    %121 = vmatpush1.msra.mxu0 0.0
    %122 = vmatprep.subr.mxu0 0.0
    %123 = vmatpush1.msra.mxu0 0.0
    %124 = vmatprep.subr.mxu0 0.0
    %125 = vmatpush1.msra.mxu0 0.0
    %126 = vmatprep.subr.mxu0 0.0
    %127 = vmatpush1.msra.mxu0 0.0
    %128 = vmatprep.subr.mxu0 0.0
    %129 = vmatpush1.msra.mxu0 0.0
    %130 = vmatprep.subr.mxu0 0.0
    %131 = vmatpush1.msra.mxu0 0.0
    %132 = vmatprep.subr.mxu0 0.0
    %133 = vmatpush1.msra.mxu0 0.0
    %134 = vmatprep.subr.mxu0 0.0
    %135 = vmatpush1.msra.mxu0 0.0
    %136 = vmatprep.subr.mxu0 0.0
    %137 = vmatpush1.msra.mxu0 0.0
    %138 = vmatprep.subr.mxu0 0.0
    %139 = vmatpush1.msra.mxu0 0.0
    %140 = vmatprep.subr.mxu0 0.0
    %141 = vmatpush1.msra.mxu0 0.0
    %142 = vmatprep.subr.mxu0 0.0
    %143 = vmatpush1.msra.mxu0 0.0
    %144 = vmatprep.subr.mxu0 0.0
    %145 = vmatpush1.msra.mxu0 0.0
    %146 = vmatprep.subr.mxu0 0.0
    %147 = vmatpush1.msra.mxu0 0.0
    %148 = vmatprep.subr.mxu0 0.0
    %149 = vmatpush1.msra.mxu0 0.0
    %150 = vmatprep.subr.mxu0 0.0
    %151 = vmatpush1.msra.mxu0 0.0
    %152 = vmatprep.subr.mxu0 0.0
    %153 = vmatpush1.msra.mxu0 0.0
    %154 = vmatprep.subr.mxu0 0.0
    %155 = vmatpush1.msra.mxu0 0.0
    %156 = vmatprep.subr.mxu0 0.0
    %157 = vmatpush1.msra.mxu0 0.0
    %158 = vmatprep.subr.mxu0 0.0
    %159 = vmatpush1.msra.mxu0 0.0
    %160 = vmatprep.subr.mxu0 0.0
    %161 = vmatpush1.msra.mxu0 0.0
    %162 = vmatprep.subr.mxu0 0.0
    %163 = vmatpush1.msra.mxu0 0.0
    %164 = vmatprep.subr.mxu0 0.0
    %165 = vmatpush1.msra.mxu0 0.0
    %166 = vmatprep.subr.mxu0 0.0
    %167 = vmatpush1.msra.mxu0 0.0
    %168 = vmatprep.subr.mxu0 0.0
    %169 = vmatpush1.msra.mxu0 0.0
    %170 = vmatprep.subr.mxu0 0.0
    %171 = vmatpush1.msra.mxu0 0.0
    %172 = vmatprep.subr.mxu0 0.0
    %173 = vmatpush1.msra.mxu0 0.0
    %174 = vmatprep.subr.mxu0 0.0
    %175 = vmatpush1.msra.mxu0 0.0
    %176 = vmatprep.mubr.f32.mxu0 0.0
    %177 = vmatmul.mubr.f32.gmra.mrb[0].mxu0 %v110
    %v178 = vpop.f32.mrb[0].mxu0
    %v179 = vadd.f32 0.0, %v178
    %v180 = vpop.f32.mrb[0].mxu0
    %181 = vdwg.mxu0
    %182 = vst.msk [vmem:[#allocation2] sm:$0xff] %vm30, %v179
    // Predicated region
    $region18: #{_forward.1} parent=1 // pred_check
      _
    $region19: #{_forward.1} parent=1 // pred_check_branch
      %184 = sbr.rel (0) target = $region21
    $region20: #{_forward.1} parent=1 // pred_region
      %s186 = ssub.s32 128, 128
      %187 = vsyncadd [#allocation3], %s186
      %s189 = sshll.u32 [#allocation2], 4
      %s190 = int_to_ptr.vmem [resolvable:$true] %s189
      %192 = dma.vmem_to_hbm [thread:$0]  %s190, 128, %s4, [#allocation3]
    $region21: #{_forward.1} parent=1 // pred_fallthru
      _
    // Predicated region
    $region22: #{_forward.1} parent=1 // pred_check
      _
    $region23: #{_forward.1} parent=1 // pred_check_branch
      %194 = sbr.rel (0) target = $region25
    $region24: #{_forward.1} parent=1 // pred_region
      %195 = dma.done [#allocation3], 128
    $region25: #{_forward.1} parent=1 // pred_fallthru
      _
    %196 = vsyncpa [#allocation3], 1

</llo_original>
